<compile_context>
chip_gen: v7x
topology: tpu7x:2x2x1
jax: 0.10.0
libtpu: 0.0.40
codegen_flags: <defaults>
</compile_context>

<pallas_src>
import numpy as np
import jax
import jax.numpy as jnp
from jax.experimental import pallas as pl
from jax.experimental.pallas import tpu as pltpu


# ----------------------------------------------------------------------------
# Pallas kernel: copy one (tm, lane) tile.
# ----------------------------------------------------------------------------
def _identity_kernel(x_ref, o_ref):
    o_ref[...] = x_ref[...]


# ----------------------------------------------------------------------------
# Wrapper: flatten -> lane-dense 2D layout -> tiled copy -> reshape back.
# ----------------------------------------------------------------------------
def identity_forward(x, *, tm=512, lane=512):
    """Identity forward pass implemented as a tiled, lane-dense Pallas copy
    kernel.  Works for any shape / dtype; returns an array equal to `x`."""
    orig_shape = x.shape
    orig_dtype = x.dtype
    flat = x.reshape(-1)
    total = flat.size

    # Lane width: multiple of 128, shrunk for tiny inputs to limit padding.
    lane = max(128, (lane // 128) * 128)
    while lane > 128 and total < lane * 8:
        lane //= 2                      # 512 -> 256 -> 128, all multiples of 128

    rows = pl.cdiv(total, lane)
    # Row tile: multiple of 8, capped at `tm` (big tiles amortize grid overhead).
    tm_eff = min(max(8, (tm // 8) * 8), max(8, ((rows + 7) // 8) * 8))
    rows_pad = pl.cdiv(rows, tm_eff) * tm_eff

    padded = jnp.pad(flat, (0, rows_pad * lane - total))
    x2d = padded.reshape(rows_pad, lane)

    grid = (rows_pad // tm_eff,)
    out = pl.pallas_call(
        _identity_kernel,
        out_shape=jax.ShapeDtypeStruct((rows_pad, lane), orig_dtype),
        grid=grid,
        in_specs=[pl.BlockSpec((tm_eff, lane), lambda i: (i, 0))],
        out_specs=pl.BlockSpec((tm_eff, lane), lambda i: (i, 0)),
        compiler_params=pltpu.CompilerParams(
            dimension_semantics=("parallel",)),
    )(x2d)

    return out.reshape(-1)[:total].reshape(orig_shape)


if __name__ == "__main__":
    key = jax.random.PRNGKey(0)

    # Small deterministic inputs consistent with a generic forward(x) module.
    x = jax.random.normal(key, (2, 4, 16, 16), dtype=jnp.float32)
    y = identity_forward(x)
    jax.block_until_ready(y)
    assert y.shape == x.shape and y.dtype == x.dtype
    np.testing.assert_array_equal(np.asarray(y), np.asarray(x))

    # A second shape/dtype to exercise the lane-dense path with >1 vreg lanes.
    x2 = jax.random.normal(jax.random.PRNGKey(1), (16, 1024), dtype=jnp.bfloat16)
    y2 = identity_forward(x2)
    jax.block_until_ready(y2)
    assert y2.shape == x2.shape and y2.dtype == x2.dtype
    np.testing.assert_array_equal(np.asarray(y2), np.asarray(x2))

    print("KERNEL_OK")
</pallas_src>

<mosaic_0001>
module attributes {stable_mosaic.version = 11 : i64} {
  func.func @_identity_kernel(%arg0: i32, %arg1: memref<8x256xf32, #tpu.memory_space<vmem>>, %arg2: memref<8x256xf32, #tpu.memory_space<vmem>>) attributes {dimension_semantics = [#tpu.dimension_semantics<parallel>], iteration_bounds = array<i64: 1>, scalar_prefetch = 0 : i64, scratch_operands = 0 : i64, tpu.core_type = #tpu.core_type<tc>, window_params = [{transform_indices = @transform_0, window_bounds = array<i64: 8, 256>}, {transform_indices = @transform_1, window_bounds = array<i64: 8, 256>}]} {
    %c0 = arith.constant 0 : index
    %c0_0 = arith.constant 0 : index
    %0 = vector.load %arg1[%c0, %c0_0] : memref<8x256xf32, #tpu.memory_space<vmem>>, vector<8x256xf32>
    %c0_1 = arith.constant 0 : index
    %c0_2 = arith.constant 0 : index
    %1 = vector.load %arg2[%c0_1, %c0_2] : memref<8x256xf32, #tpu.memory_space<vmem>>, vector<8x256xf32>
    tpu.vector_store %arg2[%c0_1, %c0_2], %0 {strides = array<i32>} : memref<8x256xf32, #tpu.memory_space<vmem>>, vector<8x256xf32>,
    return
  }
  func.func @transform_0(%arg0: i32) -> (i32, i32) {
    %c0_i32 = arith.constant 0 : i32
    %c0_i32_0 = arith.constant 0 : i32
    return %arg0, %c0_i32 : i32, i32
  }
  func.func @transform_1(%arg0: i32) -> (i32, i32) {
    %c0_i32 = arith.constant 0 : i32
    %c0_i32_0 = arith.constant 0 : i32
    return %arg0, %c0_i32 : i32, i32
  }
}

</mosaic_0001>

<llo_original>
// kernel: tpu_custom_call.1
$region0: #{tpu_custom_call.1}
  #allocation0 [shape = 'u32[]', space=smem, size = 0x4, offset = 0x4, fixed_abs, tag = 'smem constant byte address 0x4 - core index']
  #allocation1 [shape = 'u32[144,128]{1,0:T(1,128)}', space=vmem, size = 0x12000, scoped, tag = 'internal scratch']
  %s0 = inlined_call_operand.hbm [shape: f32[8,256], index: 0, kind: input, shape index: {}]
  %s1 = inlined_call_operand.hbm [shape: f32[8,256], index: 1, kind: output, shape index: {}]
  %s2 = sld [smem:[#allocation0]]
  $region18: #{tpu_custom_call.1} parent=0
    _
  %s4 = ssub.s32 1, %s2
  %s5 = scalar_select 0, %s4, %s2
  $region1: #{tpu_custom_call.1} parent=0
    #allocation2 [shape = 'u8[8192]{0}', space=vmem, size = 0x2000, scoped, tag = 'input window, operand 0, single buffered']
    #allocation3 [shape = 's32[1]{0}', space=sflag, size = 0x4, scoped, tag = 'scoped memory for tpu_custom_call.1']
    #allocation4 [shape = 's32[1]{0}', space=sflag, size = 0x4, scoped, tag = 'scoped memory for tpu_custom_call.1']
    #allocation5 [shape = 'u8[8192]{0}', space=vmem, size = 0x2000, scoped, tag = 'output window, operand 0, single buffered']
    %6 = vsyncpa [#allocation3], 0
    %7 = vsyncpa [#allocation4], 0
    // Predicated region
    $region2: #{tpu_custom_call.1} parent=1 // pred_check
      _
    $region3: #{tpu_custom_call.1} parent=1 // pred_check_branch
      %9 = sbr.rel (0) target = $region5
    $region4: #{tpu_custom_call.1} parent=1 // pred_region
      %s11 = ssub.s32 256, 256
      %12 = vsyncadd [#allocation3], %s11
      %s14 = sshll.u32 [#allocation2], 4
      %s15 = int_to_ptr.vmem [resolvable:$true] %s14
      %17 = dma.hbm_to_vmem [thread:$0]  %s0, 256, %s15, [#allocation3]
    $region5: #{tpu_custom_call.1} parent=1 // pred_fallthru
      _
    // Predicated region
    $region6: #{tpu_custom_call.1} parent=1 // pred_check
      _
    $region7: #{tpu_custom_call.1} parent=1 // pred_check_branch
      %19 = sbr.rel (0) target = $region9
    $region8: #{tpu_custom_call.1} parent=1 // pred_region
      %20 = dma.done [#allocation3], 256
    $region9: #{tpu_custom_call.1} parent=1 // pred_fallthru
      _
    %v21 = vld [vmem:[#allocation2] sm:$0xff]
    %v22 = vld [vmem:[#allocation2 + $0x8] sm:$0xff]
    %23 = vst [vmem:[#allocation5] sm:$0xff] %v21
    %24 = vst [vmem:[#allocation5 + $0x8] sm:$0xff] %v22
    // Predicated region
    $region10: #{tpu_custom_call.1} parent=1 // pred_check
      _
    $region11: #{tpu_custom_call.1} parent=1 // pred_check_branch
      %26 = sbr.rel (0) target = $region13
    $region12: #{tpu_custom_call.1} parent=1 // pred_region
      %s28 = ssub.s32 256, 256
      %29 = vsyncadd [#allocation4], %s28
      %s31 = sshll.u32 [#allocation5], 4
      %s32 = int_to_ptr.vmem [resolvable:$true] %s31
      %34 = dma.vmem_to_hbm [thread:$0]  %s32, 256, %s1, [#allocation4]
    $region13: #{tpu_custom_call.1} parent=1 // pred_fallthru
      _
    // Predicated region
    $region14: #{tpu_custom_call.1} parent=1 // pred_check
      _
    $region15: #{tpu_custom_call.1} parent=1 // pred_check_branch
      %36 = sbr.rel (0) target = $region17
    $region16: #{tpu_custom_call.1} parent=1 // pred_region
      %37 = dma.done [#allocation4], 256
    $region17: #{tpu_custom_call.1} parent=1 // pred_fallthru
      _
    %38 = vsyncpa [#allocation3], 1
    %39 = vsyncpa [#allocation4], 1

</llo_original>
